<compile_context>
chip_gen: v7x
topology: tpu7x:2x2x1
jax: 0.10.0
libtpu: 0.0.40
codegen_flags: <defaults>
</compile_context>

<pallas_src>
import math
from typing import Any, NamedTuple

import jax
import jax.numpy as jnp
from jax.experimental import pallas as pl
from jax.experimental.pallas import tpu as pltpu


def _round_up(x, m):
    return ((x + m - 1) // m) * m


def _vmem_capacity_bytes():
    try:
        return int(pltpu.get_tpu_info().vmem_capacity_bytes)
    except Exception:
        return 64 * 1024 * 1024  # conservative: v7x per-TC VMEM


# ----------------------------- kernels --------------------------------------


def _vlinear_kernel_fused(x_ref, w_ref, b_ref, o_ref):
    """Single K step: no accumulator scratch, bias folded into the only store.

    x_ref: (et, tm, tk), w_ref: (et, tk, tn), b_ref: (et, 1, tn),
    o_ref: (et, tm, tn)
    """
    acc = jnp.einsum("emk,ekn->emn", x_ref[...], w_ref[...],
                     preferred_element_type=jnp.float32)
    o_ref[...] = (acc + b_ref[...].astype(jnp.float32)).astype(o_ref.dtype)


def _vlinear_kernel_acc(x_ref, w_ref, b_ref, o_ref, acc_ref):
    """Multi-K reduction: resident f32 accumulator, bias folded into init."""
    k = pl.program_id(3)

    @pl.when(k == 0)
    def _init():
        acc_ref[...] = jnp.broadcast_to(
            b_ref[...].astype(jnp.float32), acc_ref.shape)

    acc_ref[...] += jnp.einsum("emk,ekn->emn", x_ref[...], w_ref[...],
                               preferred_element_type=jnp.float32)

    @pl.when(k == pl.num_programs(3) - 1)
    def _finalize():
        o_ref[...] = acc_ref[...].astype(o_ref.dtype)


# ----------------------------- planning -------------------------------------


class _Plan(NamedTuple):
    E: int
    B: int
    K: int
    N: int
    Bp: int
    Kp: int
    Np: int
    et: int
    tm: int
    tn: int
    tk: int
    n_k: int
    out_dtype: Any
    compute_dtype: Any
    vmem_limit: int
    cost: Any


def make_plan(E, B, K, N, *, x_dtype=jnp.float32, compute_dtype=None,
              tm_max=None, tn_max=None, tk_max=None,
              vmem_budget_bytes=None):
    """Shape-static tiling / batching decisions (do once per shape)."""
    out_dtype = jnp.dtype(x_dtype)
    cdt = jnp.dtype(compute_dtype) if compute_dtype is not None else out_dtype

    vmem_cap = _vmem_capacity_bytes()
    big_vmem = vmem_cap >= 96 * 1024 * 1024      # v5e/v6e (128 MiB) vs v7x (64 MiB)
    if tm_max is None:
        tm_max = 512 if big_vmem else 256
    if tn_max is None:
        tn_max = 1024 if big_vmem else 512
    if tk_max is None:
        tk_max = 1024 if big_vmem else 512
    if vmem_budget_bytes is None:
        vmem_budget_bytes = (88 if big_vmem else 40) * 1024 * 1024
    vmem_clamp = (110 if big_vmem else 56) * 1024 * 1024

    # Packed-sublane multiple for the compute dtype: 8 (f32), 16 (bf16), 32 (8-bit).
    sub = (8 * 4) // jnp.dtype(cdt).itemsize
    tm = min(_round_up(B, sub), tm_max)
    tn = min(_round_up(N, 128), tn_max)
    tk = min(_round_up(K, 128), tk_max)
    Bp = _round_up(B, tm)
    Np = _round_up(N, tn)
    Kp = _round_up(K, tk)
    n_m, n_n, n_k = Bp // tm, Np // tn, Kp // tk

    xb = jnp.dtype(cdt).itemsize
    wb = jnp.dtype(cdt).itemsize
    bb = jnp.dtype(out_dtype).itemsize
    ob = jnp.dtype(out_dtype).itemsize

    def working_set(et):
        ws = 2 * et * (tm * tk * xb + tk * tn * wb + tn * bb)  # dbl-buffered in
        ws += 2 * et * tm * tn * ob                            # dbl-buffered out
        if n_k > 1:
            ws += et * tm * tn * 4                             # f32 accumulator
        return ws

    # Ensemble batching: biggest divisor of E whose working set fits the budget.
    divisors = [d for d in range(E, 0, -1) if E % d == 0]
    et = 1
    for d in divisors:
        if working_set(d) <= vmem_budget_bytes:
            et = d
            break
    # Keep >= 2 parallel grid steps (2 TensorCores on v7x) unless launch-bound tiny.
    tiny = 2 * E * Bp * Kp * Np <= (1 << 24)
    if not tiny and et > 1 and (E // et) * n_m * n_n < 2:
        for d in divisors:
            if (d <= et and (E // d) * n_m * n_n >= 2
                    and working_set(d) <= vmem_budget_bytes):
                et = d
                break

    vmem_limit = int(min(max(2 * working_set(et), 32 * 1024 * 1024), vmem_clamp))

    flops = 2 * E * Bp * Kp * Np
    bytes_accessed = (E * Bp * Kp * xb * n_n       # x re-read per N tile
                      + E * Kp * Np * wb * n_m     # w re-read per M tile
                      + E * Np * bb
                      + E * Bp * Np * ob)
    cost = pl.CostEstimate(flops=flops, transcendentals=0,
                           bytes_accessed=bytes_accessed)

    return _Plan(E, B, K, N, Bp, Kp, Np, et, tm, tn, tk, n_k,
                 out_dtype, cdt, vmem_limit, cost)


def prepare_params(weight, bias, plan):
    """Pad / cast the parameters ONCE, outside the hot path.

    weight: (E, K, N) -> (E, Kp, Np) in plan.compute_dtype
    bias:   (E, 1, N) -> (E, 1,  Np) (kept in its own dtype)
    """
    E, K, N = weight.shape
    assert (E, K, N) == (plan.E, plan.K, plan.N), (weight.shape, plan)
    assert bias.shape == (E, 1, N), bias.shape
    w = weight.astype(plan.compute_dtype)
    if (plan.Kp, plan.Np) != (K, N):
        w = jnp.pad(w, ((0, 0), (0, plan.Kp - K), (0, plan.Np - N)))
    b = bias
    if plan.Np != N:
        b = jnp.pad(b, ((0, 0), (0, 0), (0, plan.Np - N)))
    return w, b


def vectorized_linear_prepared(x, weight_p, bias_p, plan):
    """out[e] = x[e] @ weight[e] + bias[e], with pre-padded/cast parameters."""
    E, B, K = x.shape
    assert (E, B, K) == (plan.E, plan.B, plan.K), (x.shape, plan)

    x = x.astype(plan.compute_dtype)
    if (plan.Bp, plan.Kp) != (B, K):
        x = jnp.pad(x, ((0, 0), (0, plan.Bp - B), (0, plan.Kp - K)))

    et, tm, tn, tk = plan.et, plan.tm, plan.tn, plan.tk
    grid_e, grid_m, grid_n = plan.E // et, plan.Bp // tm, plan.Np // tn

    if plan.n_k == 1:
        # Common case: whole K reduction in one tile -> no accumulator scratch.
        grid = (grid_e, grid_m, grid_n)
        in_specs = [
            pl.BlockSpec((et, tm, tk), lambda e, m, n: (e, m, 0)),
            pl.BlockSpec((et, tk, tn), lambda e, m, n: (e, 0, n)),
            pl.BlockSpec((et, 1, tn), lambda e, m, n: (e, 0, n)),
        ]
        out_specs = pl.BlockSpec((et, tm, tn), lambda e, m, n: (e, m, n))
        scratch = []
        kernel = _vlinear_kernel_fused
        semantics = ("parallel", "parallel", "parallel")
    else:
        grid = (grid_e, grid_m, grid_n, plan.n_k)
        in_specs = [
            pl.BlockSpec((et, tm, tk), lambda e, m, n, k: (e, m, k)),
            pl.BlockSpec((et, tk, tn), lambda e, m, n, k: (e, k, n)),
            pl.BlockSpec((et, 1, tn), lambda e, m, n, k: (e, 0, n)),
        ]
        out_specs = pl.BlockSpec((et, tm, tn), lambda e, m, n, k: (e, m, n))
        scratch = [pltpu.VMEM((et, tm, tn), jnp.float32)]
        kernel = _vlinear_kernel_acc
        semantics = ("parallel", "parallel", "parallel", "arbitrary")

    out = pl.pallas_call(
        kernel,
        out_shape=jax.ShapeDtypeStruct((plan.E, plan.Bp, plan.Np), plan.out_dtype),
        grid_spec=pltpu.PrefetchScalarGridSpec(
            num_scalar_prefetch=0,
            grid=grid,
            in_specs=in_specs,
            out_specs=out_specs,
            scratch_shapes=scratch,
        ),
        compiler_params=pltpu.CompilerParams(
            dimension_semantics=semantics,
            vmem_limit_bytes=plan.vmem_limit,
        ),
        cost_estimate=plan.cost,
    )(x, weight_p, bias_p)

    if (plan.Bp, plan.Np) != (plan.B, plan.N):
        out = out[:, :plan.B, :plan.N]
    return out


def vectorized_linear(x, weight, bias, *, compute_dtype=None, **plan_kwargs):
    """One-shot convenience wrapper (plans + pads params per call).

    For repeated calls with the same parameters, use make_plan +
    prepare_params once and call vectorized_linear_prepared in the hot path.
    """
    E, B, K = x.shape
    _, _, N = weight.shape
    plan = make_plan(E, B, K, N, x_dtype=x.dtype, compute_dtype=compute_dtype,
                     **plan_kwargs)
    w_p, b_p = prepare_params(weight, bias, plan)
    return vectorized_linear_prepared(x, w_p, b_p, plan)


def init_params(key, in_features, out_features, ensemble_size, dtype=jnp.float32):
    """Matches PyTorch reset_parameters: kaiming_uniform_(a=sqrt(5)) per member
    -> U(-1/sqrt(fan_in), 1/sqrt(fan_in)); bias -> U(-1/sqrt(fan_in), 1/sqrt(fan_in))."""
    kw, kb = jax.random.split(key)
    fan_in = in_features
    bound = 1.0 / math.sqrt(fan_in) if fan_in > 0 else 0.0
    weight = jax.random.uniform(
        kw, (ensemble_size, in_features, out_features), dtype,
        minval=-bound, maxval=bound)
    bias = jax.random.uniform(
        kb, (ensemble_size, 1, out_features), dtype,
        minval=-bound, maxval=bound)
    return weight, bias


if __name__ == "__main__":
    key = jax.random.PRNGKey(0)

    # --- Case 1: module-like small shapes (single-K fused path, et batching) --
    ensemble_size, batch, in_features, out_features = 4, 8, 32, 32
    kx, kp, k2 = jax.random.split(key, 3)
    x = jax.random.normal(kx, (ensemble_size, batch, in_features), jnp.float32)
    weight, bias = init_params(kp, in_features, out_features, ensemble_size)
    ref = jnp.einsum("ebk,ekn->ebn", x, weight) + bias

    # Pre-plan / pre-pad the parameters once (hot-path style).
    plan = make_plan(ensemble_size, batch, in_features, out_features,
                     x_dtype=x.dtype)
    w_p, b_p = prepare_params(weight, bias, plan)
    out = jax.block_until_ready(vectorized_linear_prepared(x, w_p, b_p, plan))
    assert out.shape == (ensemble_size, batch, out_features)
    assert jnp.allclose(out, ref, atol=1e-5, rtol=1e-5)

    # bf16 MXU-operand path (f32 accumulation), looser tolerance.
    out_bf16 = jax.block_until_ready(
        vectorized_linear(x, weight, bias, compute_dtype=jnp.bfloat16))
    assert out_bf16.shape == (ensemble_size, batch, out_features)
    assert jnp.allclose(out_bf16, ref, atol=1e-2, rtol=1e-2)

    # --- Case 2: forces multi-tile M/N and multi-step K reduction -------------
    E2, B2, K2, N2 = 2, 16, 256, 256
    kx2, kp2 = jax.random.split(k2)
    x2 = jax.random.normal(kx2, (E2, B2, K2), jnp.float32)
    w2, b2 = init_params(kp2, K2, N2, E2)
    out2 = jax.block_until_ready(
        vectorized_linear(x2, w2, b2, tm_max=8, tn_max=128, tk_max=128))
    ref2 = jnp.einsum("ebk,ekn->ebn", x2, w2) + b2
    assert out2.shape == (E2, B2, N2)
    assert jnp.allclose(out2, ref2, atol=1e-4, rtol=1e-4)

    print("KERNEL_OK")
</pallas_src>

<mosaic_0001>
module attributes {stable_mosaic.version = 11 : i64} {
  func.func @_vlinear_kernel_fused(%arg0: i32, %arg1: i32, %arg2: i32, %arg3: memref<4x8x128xf32, #tpu.memory_space<vmem>>, %arg4: memref<4x128x128xf32, #tpu.memory_space<vmem>>, %arg5: memref<4x1x128xf32, #tpu.memory_space<vmem>>, %arg6: memref<4x8x128xf32, #tpu.memory_space<vmem>>) attributes {dimension_semantics = [#tpu.dimension_semantics<parallel>, #tpu.dimension_semantics<parallel>, #tpu.dimension_semantics<parallel>], iteration_bounds = array<i64: 1, 1, 1>, scalar_prefetch = 0 : i64, scratch_operands = 0 : i64, tpu.core_type = #tpu.core_type<tc>, window_params = [{transform_indices = @transform_0, window_bounds = array<i64: 4, 8, 128>}, {transform_indices = @transform_1, window_bounds = array<i64: 4, 128, 128>}, {transform_indices = @transform_2, window_bounds = array<i64: 4, 1, 128>}, {transform_indices = @transform_3, window_bounds = array<i64: 4, 8, 128>}]} {
    %c0 = arith.constant 0 : index
    %c0_0 = arith.constant 0 : index
    %c0_1 = arith.constant 0 : index
    %0 = vector.load %arg3[%c0, %c0_0, %c0_1] : memref<4x8x128xf32, #tpu.memory_space<vmem>>, vector<4x8x128xf32>
    %c0_2 = arith.constant 0 : index
    %c0_3 = arith.constant 0 : index
    %c0_4 = arith.constant 0 : index
    %1 = vector.load %arg4[%c0_2, %c0_3, %c0_4] : memref<4x128x128xf32, #tpu.memory_space<vmem>>, vector<4x128x128xf32>
    "tpu.trace_start"() <{level = 10 : i32, message = "emk,ekn->emn"}> : () -> ()
    %cst = arith.constant dense<0.000000e+00> : vector<4x8x128xf32>
    %2 = tpu.matmul %0, %1, %cst {dimension_numbers = #tpu.dot_dimension_numbers<[2], [1], [1], [2], [0, 0, 0, 1, 1, 2], [0], [0]>} : vector<4x8x128xf32>, vector<4x128x128xf32>, vector<4x8x128xf32> -> vector<4x8x128xf32>
    "tpu.trace_stop"() : () -> ()
    %c0_5 = arith.constant 0 : index
    %c0_6 = arith.constant 0 : index
    %c0_7 = arith.constant 0 : index
    %3 = vector.load %arg5[%c0_5, %c0_6, %c0_7] : memref<4x1x128xf32, #tpu.memory_space<vmem>>, vector<4x1x128xf32>
    %4 = vector.broadcast %3 : vector<4x1x128xf32> to vector<4x8x128xf32>
    %5 = arith.addf %2, %4 : vector<4x8x128xf32>
    %c0_8 = arith.constant 0 : index
    %c0_9 = arith.constant 0 : index
    %c0_10 = arith.constant 0 : index
    %6 = vector.load %arg6[%c0_8, %c0_9, %c0_10] : memref<4x8x128xf32, #tpu.memory_space<vmem>>, vector<4x8x128xf32>
    tpu.vector_store %arg6[%c0_8, %c0_9, %c0_10], %5 {strides = array<i32>} : memref<4x8x128xf32, #tpu.memory_space<vmem>>, vector<4x8x128xf32>,
    return
  }
  func.func @transform_0(%arg0: i32, %arg1: i32, %arg2: i32) -> (i32, i32, i32) {
    %c0_i32 = arith.constant 0 : i32
    %c0_i32_0 = arith.constant 0 : i32
    return %arg0, %arg1, %c0_i32 : i32, i32, i32
  }
  func.func @transform_1(%arg0: i32, %arg1: i32, %arg2: i32) -> (i32, i32, i32) {
    %c0_i32 = arith.constant 0 : i32
    %c0_i32_0 = arith.constant 0 : i32
    return %arg0, %c0_i32, %arg2 : i32, i32, i32
  }
  func.func @transform_2(%arg0: i32, %arg1: i32, %arg2: i32) -> (i32, i32, i32) {
    %c0_i32 = arith.constant 0 : i32
    %c0_i32_0 = arith.constant 0 : i32
    return %arg0, %c0_i32, %arg2 : i32, i32, i32
  }
  func.func @transform_3(%arg0: i32, %arg1: i32, %arg2: i32) -> (i32, i32, i32) {
    %c0_i32 = arith.constant 0 : i32
    return %arg0, %arg1, %arg2 : i32, i32, i32
  }
}

</mosaic_0001>

<llo_original>
// kernel: tpu_custom_call.1
$region0: #{tpu_custom_call.1}
  #allocation0 [shape = 'u32[]', space=smem, size = 0x4, offset = 0x4, fixed_abs, tag = 'smem constant byte address 0x4 - core index']
  #allocation1 [shape = 'u32[144,128]{1,0:T(1,128)}', space=vmem, size = 0x12000, scoped, tag = 'internal scratch']
  %s0 = inlined_call_operand.hbm [shape: f32[4,8,128], index: 0, kind: input, shape index: {}]
  %s1 = inlined_call_operand.hbm [shape: f32[4,128,128], index: 1, kind: input, shape index: {}]
  %s2 = inlined_call_operand.vmem [shape: f32[4,1,128], index: 2, kind: input, shape index: {}]
  %s3 = inlined_call_operand.hbm [shape: f32[4,8,128], index: 3, kind: output, shape index: {}]
  %s4 = sld [smem:[#allocation0]]
  $region30: #{tpu_custom_call.1} parent=0
    _
  %s6 = ssub.s32 1, %s4
  %s7 = scalar_select 0, %s6, %s4
  $region1: #{tpu_custom_call.1} parent=0
    #allocation2 [shape = 'u8[16384]{0}', space=vmem, size = 0x4000, scoped, tag = 'input window, operand 0, single buffered']
    #allocation3 [shape = 's32[1]{0}', space=sflag, size = 0x4, scoped, tag = 'scoped memory for tpu_custom_call.1']
    #allocation4 [shape = 's32[1]{0}', space=sflag, size = 0x4, scoped, tag = 'scoped memory for tpu_custom_call.1']
    #allocation5 [shape = 'u8[262144]{0}', space=vmem, size = 0x40000, scoped, tag = 'input window, operand 1, single buffered']
    #allocation6 [shape = 's32[1]{0}', space=sflag, size = 0x4, scoped, tag = 'scoped memory for tpu_custom_call.1']
    #allocation7 [shape = 'u8[16384]{0}', space=vmem, size = 0x4000, scoped, tag = 'output window, operand 0, single buffered']
    %8 = vsyncpa [#allocation3], 0
    %9 = vsyncpa [#allocation6], 0
    %10 = vsyncpa [#allocation4], 0
    // Predicated region
    $region2: #{tpu_custom_call.1} parent=1 // pred_check
      _
    $region3: #{tpu_custom_call.1} parent=1 // pred_check_branch
      %12 = sbr.rel (0) target = $region5
    $region4: #{tpu_custom_call.1} parent=1 // pred_region
      %s14 = ssub.s32 512, 512
      %15 = vsyncadd [#allocation3], %s14
      %s16 = sshll.u32 [#allocation2], 4
      %s17 = int_to_ptr.vmem [resolvable:$true] %s16
      %22 = dma.hbm_to_vmem [thread:$0]  %s0, 512, %s17, [#allocation3], 128, 128, 8
    $region5: #{tpu_custom_call.1} parent=1 // pred_fallthru
      _
    // Predicated region
    $region6: #{tpu_custom_call.1} parent=1 // pred_check
      _
    $region7: #{tpu_custom_call.1} parent=1 // pred_check_branch
      %24 = sbr.rel (0) target = $region9
    $region8: #{tpu_custom_call.1} parent=1 // pred_region
      %s26 = ssub.s32 8192, 8192
      %27 = vsyncadd [#allocation6], %s26
      %s28 = sshll.u32 [#allocation5], 4
      %s29 = int_to_ptr.vmem [resolvable:$true] %s28
      %34 = dma.hbm_to_vmem [thread:$0]  %s1, 8192, %s29, [#allocation6], 128, 128, 8
    $region9: #{tpu_custom_call.1} parent=1 // pred_fallthru
      _
    // Predicated region
    $region10: #{tpu_custom_call.1} parent=1 // pred_check
      _
    $region11: #{tpu_custom_call.1} parent=1 // pred_check_branch
      %36 = sbr.rel (0) target = $region13
    $region12: #{tpu_custom_call.1} parent=1 // pred_region
      _
    $region13: #{tpu_custom_call.1} parent=1 // pred_fallthru
      _
    // Predicated region
    $region14: #{tpu_custom_call.1} parent=1 // pred_check
      _
    $region15: #{tpu_custom_call.1} parent=1 // pred_check_branch
      %38 = sbr.rel (0) target = $region17
    $region16: #{tpu_custom_call.1} parent=1 // pred_region
      %39 = dma.done [#allocation3], 512
    $region17: #{tpu_custom_call.1} parent=1 // pred_fallthru
      _
    // Predicated region
    $region18: #{tpu_custom_call.1} parent=1 // pred_check
      _
    $region19: #{tpu_custom_call.1} parent=1 // pred_check_branch
      %41 = sbr.rel (0) target = $region21
    $region20: #{tpu_custom_call.1} parent=1 // pred_region
      %42 = dma.done [#allocation6], 8192
    $region21: #{tpu_custom_call.1} parent=1 // pred_fallthru
      _
    %v43 = vld [vmem:[#allocation2] sm:$0xff]
    %v44 = vld [vmem:[#allocation2 + $0x8] sm:$0xff]
    %v45 = vld [vmem:[#allocation2 + $0x10] sm:$0xff]
    %v46 = vld [vmem:[#allocation2 + $0x18] sm:$0xff]
    %v47 = vld [vmem:[#allocation5] sm:$0xff]
    %v48 = vld [vmem:[#allocation5 + $0x8] sm:$0xff]
    %v49 = vld [vmem:[#allocation5 + $0x10] sm:$0xff]
    %v50 = vld [vmem:[#allocation5 + $0x18] sm:$0xff]
    %v51 = vld [vmem:[#allocation5 + $0x20] sm:$0xff]
    %v52 = vld [vmem:[#allocation5 + $0x28] sm:$0xff]
    %v53 = vld [vmem:[#allocation5 + $0x30] sm:$0xff]
    %v54 = vld [vmem:[#allocation5 + $0x38] sm:$0xff]
    %v55 = vld [vmem:[#allocation5 + $0x40] sm:$0xff]
    %v56 = vld [vmem:[#allocation5 + $0x48] sm:$0xff]
    %v57 = vld [vmem:[#allocation5 + $0x50] sm:$0xff]
    %v58 = vld [vmem:[#allocation5 + $0x58] sm:$0xff]
    %v59 = vld [vmem:[#allocation5 + $0x60] sm:$0xff]
    %v60 = vld [vmem:[#allocation5 + $0x68] sm:$0xff]
    %v61 = vld [vmem:[#allocation5 + $0x70] sm:$0xff]
    %v62 = vld [vmem:[#allocation5 + $0x78] sm:$0xff]
    %v63 = vld [vmem:[#allocation5 + $0x80] sm:$0xff]
    %v64 = vld [vmem:[#allocation5 + $0x88] sm:$0xff]
    %v65 = vld [vmem:[#allocation5 + $0x90] sm:$0xff]
    %v66 = vld [vmem:[#allocation5 + $0x98] sm:$0xff]
    %v67 = vld [vmem:[#allocation5 + $0xa0] sm:$0xff]
    %v68 = vld [vmem:[#allocation5 + $0xa8] sm:$0xff]
    %v69 = vld [vmem:[#allocation5 + $0xb0] sm:$0xff]
    %v70 = vld [vmem:[#allocation5 + $0xb8] sm:$0xff]
    %v71 = vld [vmem:[#allocation5 + $0xc0] sm:$0xff]
    %v72 = vld [vmem:[#allocation5 + $0xc8] sm:$0xff]
    %v73 = vld [vmem:[#allocation5 + $0xd0] sm:$0xff]
    %v74 = vld [vmem:[#allocation5 + $0xd8] sm:$0xff]
    %v75 = vld [vmem:[#allocation5 + $0xe0] sm:$0xff]
    %v76 = vld [vmem:[#allocation5 + $0xe8] sm:$0xff]
    %v77 = vld [vmem:[#allocation5 + $0xf0] sm:$0xff]
    %v78 = vld [vmem:[#allocation5 + $0xf8] sm:$0xff]
    %v79 = vld [vmem:[#allocation5 + $0x100] sm:$0xff]
    %v80 = vld [vmem:[#allocation5 + $0x108] sm:$0xff]
    %v81 = vld [vmem:[#allocation5 + $0x110] sm:$0xff]
    %v82 = vld [vmem:[#allocation5 + $0x118] sm:$0xff]
    %v83 = vld [vmem:[#allocation5 + $0x120] sm:$0xff]
    %v84 = vld [vmem:[#allocation5 + $0x128] sm:$0xff]
    %v85 = vld [vmem:[#allocation5 + $0x130] sm:$0xff]
    %v86 = vld [vmem:[#allocation5 + $0x138] sm:$0xff]
    %v87 = vld [vmem:[#allocation5 + $0x140] sm:$0xff]
    %v88 = vld [vmem:[#allocation5 + $0x148] sm:$0xff]
    %v89 = vld [vmem:[#allocation5 + $0x150] sm:$0xff]
    %v90 = vld [vmem:[#allocation5 + $0x158] sm:$0xff]
    %v91 = vld [vmem:[#allocation5 + $0x160] sm:$0xff]
    %v92 = vld [vmem:[#allocation5 + $0x168] sm:$0xff]
    %v93 = vld [vmem:[#allocation5 + $0x170] sm:$0xff]
    %v94 = vld [vmem:[#allocation5 + $0x178] sm:$0xff]
    %v95 = vld [vmem:[#allocation5 + $0x180] sm:$0xff]
    %v96 = vld [vmem:[#allocation5 + $0x188] sm:$0xff]
    %v97 = vld [vmem:[#allocation5 + $0x190] sm:$0xff]
    %v98 = vld [vmem:[#allocation5 + $0x198] sm:$0xff]
    %v99 = vld [vmem:[#allocation5 + $0x1a0] sm:$0xff]
    %v100 = vld [vmem:[#allocation5 + $0x1a8] sm:$0xff]
    %v101 = vld [vmem:[#allocation5 + $0x1b0] sm:$0xff]
    %v102 = vld [vmem:[#allocation5 + $0x1b8] sm:$0xff]
    %v103 = vld [vmem:[#allocation5 + $0x1c0] sm:$0xff]
    %v104 = vld [vmem:[#allocation5 + $0x1c8] sm:$0xff]
    %v105 = vld [vmem:[#allocation5 + $0x1d0] sm:$0xff]
    %v106 = vld [vmem:[#allocation5 + $0x1d8] sm:$0xff]
    %v107 = vld [vmem:[#allocation5 + $0x1e0] sm:$0xff]
    %v108 = vld [vmem:[#allocation5 + $0x1e8] sm:$0xff]
    %v109 = vld [vmem:[#allocation5 + $0x1f0] sm:$0xff]
    %v110 = vld [vmem:[#allocation5 + $0x1f8] sm:$0xff]
    %v111 = vld [vmem:[%s2] sm:$0x1]
    %v112 = vld [vmem:[%s2 + $0x1] sm:$0x1]
    %v113 = vld [vmem:[%s2 + $0x2] sm:$0x1]
    %v114 = vld [vmem:[%s2 + $0x3] sm:$0x1]
    %v119 = vlaneseq
    %v120 = vshrl.u32 %v119, 7
    %v121 = vsub.s32 0, %v120
    %v122 = vrot.slane %v111, %v121
    %v123 = vlaneseq
    %v124 = vshrl.u32 %v123, 7
    %v125 = vsub.s32 0, %v124
    %v126 = vrot.slane %v112, %v125
    %v127 = vlaneseq
    %v128 = vshrl.u32 %v127, 7
    %v129 = vsub.s32 0, %v128
    %v130 = vrot.slane %v113, %v129
    %v131 = vlaneseq
    %v132 = vshrl.u32 %v131, 7
    %v133 = vsub.s32 0, %v132
    %v134 = vrot.slane %v114, %v133
    %139 = vmatprep.subr.mxu0 0.0
    %140 = vmatpush1.msra.mxu0 %v47
    %141 = vmatprep.subr.mxu0 0.0
    %142 = vmatpush1.msra.mxu0 %v48
    %143 = vmatprep.subr.mxu0 0.0
    %144 = vmatpush1.msra.mxu0 %v49
    %145 = vmatprep.subr.mxu0 0.0
    %146 = vmatpush1.msra.mxu0 %v50
    %147 = vmatprep.subr.mxu0 0.0
    %148 = vmatpush1.msra.mxu0 %v51
    %149 = vmatprep.subr.mxu0 0.0
    %150 = vmatpush1.msra.mxu0 %v52
    %151 = vmatprep.subr.mxu0 0.0
    %152 = vmatpush1.msra.mxu0 %v53
    %153 = vmatprep.subr.mxu0 0.0
    %154 = vmatpush1.msra.mxu0 %v54
    %155 = vmatprep.subr.mxu0 0.0
    %156 = vmatpush1.msra.mxu0 %v55
    %157 = vmatprep.subr.mxu0 0.0
    %158 = vmatpush1.msra.mxu0 %v56
    %159 = vmatprep.subr.mxu0 0.0
    %160 = vmatpush1.msra.mxu0 %v57
    %161 = vmatprep.subr.mxu0 0.0
    %162 = vmatpush1.msra.mxu0 %v58
    %163 = vmatprep.subr.mxu0 0.0
    %164 = vmatpush1.msra.mxu0 %v59
    %165 = vmatprep.subr.mxu0 0.0
    %166 = vmatpush1.msra.mxu0 %v60
    %167 = vmatprep.subr.mxu0 0.0
    %168 = vmatpush1.msra.mxu0 %v61
    %169 = vmatprep.subr.mxu0 0.0
    %170 = vmatpush1.msra.mxu0 %v62
    %171 = vmatprep.subr.mxu0 0.0
    %172 = vmatpush1.msra.mxu0 0.0
    %173 = vmatprep.subr.mxu0 0.0
    %174 = vmatpush1.msra.mxu0 0.0
    %175 = vmatprep.subr.mxu0 0.0
    %176 = vmatpush1.msra.mxu0 0.0
    %177 = vmatprep.subr.mxu0 0.0
    %178 = vmatpush1.msra.mxu0 0.0
    %179 = vmatprep.subr.mxu0 0.0
    %180 = vmatpush1.msra.mxu0 0.0
    %181 = vmatprep.subr.mxu0 0.0
    %182 = vmatpush1.msra.mxu0 0.0
    %183 = vmatprep.subr.mxu0 0.0
    %184 = vmatpush1.msra.mxu0 0.0
    %185 = vmatprep.subr.mxu0 0.0
    %186 = vmatpush1.msra.mxu0 0.0
    %187 = vmatprep.subr.mxu0 0.0
    %188 = vmatpush1.msra.mxu0 0.0
    %189 = vmatprep.subr.mxu0 0.0
    %190 = vmatpush1.msra.mxu0 0.0
    %191 = vmatprep.subr.mxu0 0.0
    %192 = vmatpush1.msra.mxu0 0.0
    %193 = vmatprep.subr.mxu0 0.0
    %194 = vmatpush1.msra.mxu0 0.0
    %195 = vmatprep.subr.mxu0 0.0
    %196 = vmatpush1.msra.mxu0 0.0
    %197 = vmatprep.subr.mxu0 0.0
    %198 = vmatpush1.msra.mxu0 0.0
    %199 = vmatprep.subr.mxu0 0.0
    %200 = vmatpush1.msra.mxu0 0.0
    %201 = vmatprep.subr.mxu0 0.0
    %202 = vmatpush1.msra.mxu0 0.0
    %203 = vmatprep.mubr.f32.mxu0 0.0
    %204 = vmatmul.mubr.f32.gmra.mrb[0].mxu0 %v43
    %v205 = vpop.f32.mrb[0].mxu0
    %v206 = vadd.f32 %v122, %v205
    %v207 = vpop.f32.mrb[0].mxu0
    %208 = vdwg.mxu0
    %209 = vmatprep.subr.mxu0 0.0
    %210 = vmatpush1.msra.mxu0 %v63
    %211 = vmatprep.subr.mxu0 0.0
    %212 = vmatpush1.msra.mxu0 %v64
    %213 = vmatprep.subr.mxu0 0.0
    %214 = vmatpush1.msra.mxu0 %v65
    %215 = vmatprep.subr.mxu0 0.0
    %216 = vmatpush1.msra.mxu0 %v66
    %217 = vmatprep.subr.mxu0 0.0
    %218 = vmatpush1.msra.mxu0 %v67
    %219 = vmatprep.subr.mxu0 0.0
    %220 = vmatpush1.msra.mxu0 %v68
    %221 = vmatprep.subr.mxu0 0.0
    %222 = vmatpush1.msra.mxu0 %v69
    %223 = vmatprep.subr.mxu0 0.0
    %224 = vmatpush1.msra.mxu0 %v70
    %225 = vmatprep.subr.mxu0 0.0
    %226 = vmatpush1.msra.mxu0 %v71
    %227 = vmatprep.subr.mxu0 0.0
    %228 = vmatpush1.msra.mxu0 %v72
    %229 = vmatprep.subr.mxu0 0.0
    %230 = vmatpush1.msra.mxu0 %v73
    %231 = vmatprep.subr.mxu0 0.0
    %232 = vmatpush1.msra.mxu0 %v74
    %233 = vmatprep.subr.mxu0 0.0
    %234 = vmatpush1.msra.mxu0 %v75
    %235 = vmatprep.subr.mxu0 0.0
    %236 = vmatpush1.msra.mxu0 %v76
    %237 = vmatprep.subr.mxu0 0.0
    %238 = vmatpush1.msra.mxu0 %v77
    %239 = vmatprep.subr.mxu0 0.0
    %240 = vmatpush1.msra.mxu0 %v78
    %241 = vmatprep.subr.mxu0 0.0
    %242 = vmatpush1.msra.mxu0 0.0
    %243 = vmatprep.subr.mxu0 0.0
    %244 = vmatpush1.msra.mxu0 0.0
    %245 = vmatprep.subr.mxu0 0.0
    %246 = vmatpush1.msra.mxu0 0.0
    %247 = vmatprep.subr.mxu0 0.0
    %248 = vmatpush1.msra.mxu0 0.0
    %249 = vmatprep.subr.mxu0 0.0
    %250 = vmatpush1.msra.mxu0 0.0
    %251 = vmatprep.subr.mxu0 0.0
    %252 = vmatpush1.msra.mxu0 0.0
    %253 = vmatprep.subr.mxu0 0.0
    %254 = vmatpush1.msra.mxu0 0.0
    %255 = vmatprep.subr.mxu0 0.0
    %256 = vmatpush1.msra.mxu0 0.0
    %257 = vmatprep.subr.mxu0 0.0
    %258 = vmatpush1.msra.mxu0 0.0
    %259 = vmatprep.subr.mxu0 0.0
    %260 = vmatpush1.msra.mxu0 0.0
    %261 = vmatprep.subr.mxu0 0.0
    %262 = vmatpush1.msra.mxu0 0.0
    %263 = vmatprep.subr.mxu0 0.0
    %264 = vmatpush1.msra.mxu0 0.0
    %265 = vmatprep.subr.mxu0 0.0
    %266 = vmatpush1.msra.mxu0 0.0
    %267 = vmatprep.subr.mxu0 0.0
    %268 = vmatpush1.msra.mxu0 0.0
    %269 = vmatprep.subr.mxu0 0.0
    %270 = vmatpush1.msra.mxu0 0.0
    %271 = vmatprep.subr.mxu0 0.0
    %272 = vmatpush1.msra.mxu0 0.0
    %273 = vmatprep.mubr.f32.mxu0 0.0
    %274 = vmatmul.mubr.f32.gmra.mrb[0].mxu0 %v44
    %v275 = vpop.f32.mrb[0].mxu0
    %v276 = vadd.f32 %v126, %v275
    %v277 = vpop.f32.mrb[0].mxu0
    %278 = vdwg.mxu0
    %279 = vmatprep.subr.mxu0 0.0
    %280 = vmatpush1.msra.mxu0 %v79
    %281 = vmatprep.subr.mxu0 0.0
    %282 = vmatpush1.msra.mxu0 %v80
    %283 = vmatprep.subr.mxu0 0.0
    %284 = vmatpush1.msra.mxu0 %v81
    %285 = vmatprep.subr.mxu0 0.0
    %286 = vmatpush1.msra.mxu0 %v82
    %287 = vmatprep.subr.mxu0 0.0
    %288 = vmatpush1.msra.mxu0 %v83
    %289 = vmatprep.subr.mxu0 0.0
    %290 = vmatpush1.msra.mxu0 %v84
    %291 = vmatprep.subr.mxu0 0.0
    %292 = vmatpush1.msra.mxu0 %v85
    %293 = vmatprep.subr.mxu0 0.0
    %294 = vmatpush1.msra.mxu0 %v86
    %295 = vmatprep.subr.mxu0 0.0
    %296 = vmatpush1.msra.mxu0 %v87
    %297 = vmatprep.subr.mxu0 0.0
    %298 = vmatpush1.msra.mxu0 %v88
    %299 = vmatprep.subr.mxu0 0.0
    %300 = vmatpush1.msra.mxu0 %v89
    %301 = vmatprep.subr.mxu0 0.0
    %302 = vmatpush1.msra.mxu0 %v90
    %303 = vmatprep.subr.mxu0 0.0
    %304 = vmatpush1.msra.mxu0 %v91
    %305 = vmatprep.subr.mxu0 0.0
    %306 = vmatpush1.msra.mxu0 %v92
    %307 = vmatprep.subr.mxu0 0.0
    %308 = vmatpush1.msra.mxu0 %v93
    %309 = vmatprep.subr.mxu0 0.0
    %310 = vmatpush1.msra.mxu0 %v94
    %311 = vmatprep.subr.mxu0 0.0
    %312 = vmatpush1.msra.mxu0 0.0
    %313 = vmatprep.subr.mxu0 0.0
    %314 = vmatpush1.msra.mxu0 0.0
    %315 = vmatprep.subr.mxu0 0.0
    %316 = vmatpush1.msra.mxu0 0.0
    %317 = vmatprep.subr.mxu0 0.0
    %318 = vmatpush1.msra.mxu0 0.0
    %319 = vmatprep.subr.mxu0 0.0
    %320 = vmatpush1.msra.mxu0 0.0
    %321 = vmatprep.subr.mxu0 0.0
    %322 = vmatpush1.msra.mxu0 0.0
    %323 = vmatprep.subr.mxu0 0.0
    %324 = vmatpush1.msra.mxu0 0.0
    %325 = vmatprep.subr.mxu0 0.0
    %326 = vmatpush1.msra.mxu0 0.0
    %327 = vmatprep.subr.mxu0 0.0
    %328 = vmatpush1.msra.mxu0 0.0
    %329 = vmatprep.subr.mxu0 0.0
    %330 = vmatpush1.msra.mxu0 0.0
    %331 = vmatprep.subr.mxu0 0.0
    %332 = vmatpush1.msra.mxu0 0.0
    %333 = vmatprep.subr.mxu0 0.0
    %334 = vmatpush1.msra.mxu0 0.0
    %335 = vmatprep.subr.mxu0 0.0
    %336 = vmatpush1.msra.mxu0 0.0
    %337 = vmatprep.subr.mxu0 0.0
    %338 = vmatpush1.msra.mxu0 0.0
    %339 = vmatprep.subr.mxu0 0.0
    %340 = vmatpush1.msra.mxu0 0.0
    %341 = vmatprep.subr.mxu0 0.0
    %342 = vmatpush1.msra.mxu0 0.0
    %343 = vmatprep.mubr.f32.mxu0 0.0
    %344 = vmatmul.mubr.f32.gmra.mrb[0].mxu0 %v45
    %v345 = vpop.f32.mrb[0].mxu0
    %v346 = vadd.f32 %v130, %v345
    %v347 = vpop.f32.mrb[0].mxu0
    %348 = vdwg.mxu0
    %349 = vmatprep.subr.mxu0 0.0
    %350 = vmatpush1.msra.mxu0 %v95
    %351 = vmatprep.subr.mxu0 0.0
    %352 = vmatpush1.msra.mxu0 %v96
    %353 = vmatprep.subr.mxu0 0.0
    %354 = vmatpush1.msra.mxu0 %v97
    %355 = vmatprep.subr.mxu0 0.0
    %356 = vmatpush1.msra.mxu0 %v98
    %357 = vmatprep.subr.mxu0 0.0
    %358 = vmatpush1.msra.mxu0 %v99
    %359 = vmatprep.subr.mxu0 0.0
    %360 = vmatpush1.msra.mxu0 %v100
    %361 = vmatprep.subr.mxu0 0.0
    %362 = vmatpush1.msra.mxu0 %v101
    %363 = vmatprep.subr.mxu0 0.0
    %364 = vmatpush1.msra.mxu0 %v102
    %365 = vmatprep.subr.mxu0 0.0
    %366 = vmatpush1.msra.mxu0 %v103
    %367 = vmatprep.subr.mxu0 0.0
    %368 = vmatpush1.msra.mxu0 %v104
    %369 = vmatprep.subr.mxu0 0.0
    %370 = vmatpush1.msra.mxu0 %v105
    %371 = vmatprep.subr.mxu0 0.0
    %372 = vmatpush1.msra.mxu0 %v106
    %373 = vmatprep.subr.mxu0 0.0
    %374 = vmatpush1.msra.mxu0 %v107
    %375 = vmatprep.subr.mxu0 0.0
    %376 = vmatpush1.msra.mxu0 %v108
    %377 = vmatprep.subr.mxu0 0.0
    %378 = vmatpush1.msra.mxu0 %v109
    %379 = vmatprep.subr.mxu0 0.0
    %380 = vmatpush1.msra.mxu0 %v110
    %381 = vmatprep.subr.mxu0 0.0
    %382 = vmatpush1.msra.mxu0 0.0
    %383 = vmatprep.subr.mxu0 0.0
    %384 = vmatpush1.msra.mxu0 0.0
    %385 = vmatprep.subr.mxu0 0.0
    %386 = vmatpush1.msra.mxu0 0.0
    %387 = vmatprep.subr.mxu0 0.0
    %388 = vmatpush1.msra.mxu0 0.0
    %389 = vmatprep.subr.mxu0 0.0
    %390 = vmatpush1.msra.mxu0 0.0
    %391 = vmatprep.subr.mxu0 0.0
    %392 = vmatpush1.msra.mxu0 0.0
    %393 = vmatprep.subr.mxu0 0.0
    %394 = vmatpush1.msra.mxu0 0.0
    %395 = vmatprep.subr.mxu0 0.0
    %396 = vmatpush1.msra.mxu0 0.0
    %397 = vmatprep.subr.mxu0 0.0
    %398 = vmatpush1.msra.mxu0 0.0
    %399 = vmatprep.subr.mxu0 0.0
    %400 = vmatpush1.msra.mxu0 0.0
    %401 = vmatprep.subr.mxu0 0.0
    %402 = vmatpush1.msra.mxu0 0.0
    %403 = vmatprep.subr.mxu0 0.0
    %404 = vmatpush1.msra.mxu0 0.0
    %405 = vmatprep.subr.mxu0 0.0
    %406 = vmatpush1.msra.mxu0 0.0
    %407 = vmatprep.subr.mxu0 0.0
    %408 = vmatpush1.msra.mxu0 0.0
    %409 = vmatprep.subr.mxu0 0.0
    %410 = vmatpush1.msra.mxu0 0.0
    %411 = vmatprep.subr.mxu0 0.0
    %412 = vmatpush1.msra.mxu0 0.0
    %413 = vmatprep.mubr.f32.mxu0 0.0
    %414 = vmatmul.mubr.f32.gmra.mrb[0].mxu0 %v46
    %v415 = vpop.f32.mrb[0].mxu0
    %v416 = vadd.f32 %v134, %v415
    %v417 = vpop.f32.mrb[0].mxu0
    %418 = vdwg.mxu0
    %419 = vst [vmem:[#allocation7] sm:$0xff] %v206
    %420 = vst [vmem:[#allocation7 + $0x8] sm:$0xff] %v276
    %421 = vst [vmem:[#allocation7 + $0x10] sm:$0xff] %v346
    %422 = vst [vmem:[#allocation7 + $0x18] sm:$0xff] %v416
    // Predicated region
    $region22: #{tpu_custom_call.1} parent=1 // pred_check
      _
    $region23: #{tpu_custom_call.1} parent=1 // pred_check_branch
      %424 = sbr.rel (0) target = $region25
    $region24: #{tpu_custom_call.1} parent=1 // pred_region
      %s426 = ssub.s32 512, 512
      %427 = vsyncadd [#allocation4], %s426
      %s428 = sshll.u32 [#allocation7], 4
      %s429 = int_to_ptr.vmem [resolvable:$true] %s428
      %434 = dma.vmem_to_hbm [thread:$0]  %s429, 512, %s3, [#allocation4], 128, 128, 8
    $region25: #{tpu_custom_call.1} parent=1 // pred_fallthru
      _
    // Predicated region
    $region26: #{tpu_custom_call.1} parent=1 // pred_check
      _
    $region27: #{tpu_custom_call.1} parent=1 // pred_check_branch
      %436 = sbr.rel (0) target = $region29
    $region28: #{tpu_custom_call.1} parent=1 // pred_region
      %437 = dma.done [#allocation4], 512
    $region29: #{tpu_custom_call.1} parent=1 // pred_fallthru
      _
    %438 = vsyncpa [#allocation3], 1
    %439 = vsyncpa [#allocation6], 1
    %440 = vsyncpa [#allocation4], 1

</llo_original>
